<compile_context>
chip_gen: v7x
topology: tpu7x:2x2x1
jax: 0.10.0
libtpu: 0.0.40
codegen_flags: <defaults>
</compile_context>

<pallas_src>
import functools
import math

import jax
import jax.numpy as jnp
from jax.experimental import pallas as pl
from jax.experimental.pallas import tpu as pltpu


# ----------------------------------------------------------------------------
# small in-kernel helpers
# ----------------------------------------------------------------------------
def _gelu(x):
    # erf-based ("exact") GELU matching torch.nn.functional.gelu default.
    # erf via Abramowitz-Stegun 7.1.26 (|err| < ~1e-6); divide on the EUP.
    a1, a2, a3, a4, a5 = (0.254829592, -0.284496736, 1.421413741,
                          -1.453152027, 1.061405429)
    p = 0.3275911
    z = x * 0.7071067811865476
    s = jnp.where(z >= 0.0, 1.0, -1.0)
    az = jnp.abs(z)
    t = pl.reciprocal(1.0 + p * az, approx=True)
    poly = ((((a5 * t + a4) * t + a3) * t + a2) * t + a1) * t
    erf = s * (1.0 - poly * jnp.exp(-az * az))
    return 0.5 * x * (1.0 + erf)


def _layernorm(x, g, b, eps=1e-5):
    mu = jnp.mean(x, axis=-1, keepdims=True)
    var = jnp.mean(jnp.square(x - mu), axis=-1, keepdims=True)
    return (x - mu) * jax.lax.rsqrt(var + eps) * g + b


def _const_spec(a):
    nd = a.ndim
    return pl.BlockSpec(a.shape, lambda *_: (0,) * nd)


def _bmm(x, w):
    # [N, L, K] x [K, O] -> [N, L, O]  as a batched MXU matmul (no reshapes).
    n = x.shape[0]
    wb = jnp.broadcast_to(w[None], (n,) + w.shape)
    return jnp.einsum("nlk,nko->nlo", x, wb,
                      preferred_element_type=jnp.float32)


# ----------------------------------------------------------------------------
# CellStateInitializer kernel  (emits a lane-dense [N, depth*H] slab)
# ----------------------------------------------------------------------------
def _cell_init_kernel(lxm_ref, w0_ref, b0_ref, w1_ref, b1_ref, w2_ref, b2_ref,
                      out_ref):
    x = _gelu(jnp.dot(lxm_ref[...], w0_ref[...],
                      preferred_element_type=jnp.float32) + b0_ref[...])
    x = _gelu(jnp.dot(x, w1_ref[...],
                      preferred_element_type=jnp.float32) + b1_ref[...])
    out_ref[...] = jnp.dot(x, w2_ref[...],
                           preferred_element_type=jnp.float32) + b2_ref[...]


def cell_state_init(kp, lxm0, rnn_depth, hidden_dim):
    N = lxm0.shape[0]
    y = pl.pallas_call(
        _cell_init_kernel,
        out_shape=jax.ShapeDtypeStruct((N, rnn_depth * hidden_dim),
                                       jnp.float32),
    )(lxm0, kp["csi_w0"], kp["csi_b0"], kp["csi_w1"], kp["csi_b1"],
      kp["csi_w2"], kp["csi_b2"])
    # [N, P*H] -> [P, N, H]   (torch: reshape(N, P, H) then 'NPD->PND')
    return jnp.transpose(y.reshape(N, rnn_depth, hidden_dim), (1, 0, 2))


# ----------------------------------------------------------------------------
# Fused AudioEncoder_Conv1d + hoisted decoder input projections.
# grid = (B-2,) windows; whole batch N handled per step; outputs the
# precomputed layer-0 GRU gate inputs gi_r / gi_z / gi_n for all BL frames.
# ----------------------------------------------------------------------------
def _encoder_gi_kernel(*refs, BL):
    (xa_ref, xb_ref, xc_ref, lxm_ref,
     w0_ref, b0_ref, w1_ref, b1_ref, w2_ref, b2_ref,
     w3_ref, b3_ref, lng_ref, lnb_ref,
     wina_ref, winl_ref, bin_ref) = refs[:17]
    gate_w = refs[17:29]                      # (wie, wia, wil, bih) x (r,z,n)
    gr_ref, gz_ref, gn_ref = refs[29:32]
    win_ref, pad_ref = refs[32:34]

    # assemble the 3*BL-frame window from the three shifted blocks
    win_ref[:, 0 * BL:1 * BL, :] = xa_ref[0]
    win_ref[:, 1 * BL:2 * BL, :] = xb_ref[0]
    win_ref[:, 2 * BL:3 * BL, :] = xc_ref[0]

    L0 = 3 * BL

    # conv0: kernel 7, stride 1, pad 0 -- taps im2col'd into the K dim
    Lc0 = L0 - 6
    xc0 = jnp.concatenate([win_ref[:, k:k + Lc0, :] for k in range(7)],
                          axis=-1)                           # [N, Lc0, 7*Cin]
    h0 = _gelu(_bmm(xc0, w0_ref[...]) + b0_ref[...])         # [N, Lc0, Ch]

    # conv1: kernel 5, stride 1, pad 0
    Lc1 = Lc0 - 4
    xc1 = jnp.concatenate([h0[:, k:k + Lc1, :] for k in range(5)], axis=-1)
    h1 = _gelu(_bmm(xc1, w1_ref[...]) + b1_ref[...])         # [N, Lc1, Ch]

    # conv2: kernel 4, stride 2, pad 1 -- zero-padded scratch + strided taps
    Lp = Lc1 + 2
    L2 = (Lp - 4) // 2 + 1
    pad_ref[...] = jnp.zeros_like(pad_ref)
    pad_ref[:, 1:1 + Lc1, :] = h1
    xc2 = jnp.concatenate(
        [pad_ref[:, pl.ds(k, L2, stride=2), :] for k in range(4)], axis=-1)
    h2 = _gelu(_bmm(xc2, w2_ref[...]) + b2_ref[...])         # [N, L2, E]

    # only the first BL frames feed the decoder
    a = h2[:, :BL, :]                                        # [N, BL, E]
    a = _gelu(_bmm(a, w3_ref[...]) + b3_ref[...])
    a = _layernorm(a, lng_ref[...], lnb_ref[...])

    # hoisted decoder projections (time-invariant w.r.t. the recurrence)
    lxm = lxm_ref[0]                                         # [N, Dl]
    lxm_in = jnp.dot(lxm, winl_ref[...],
                     preferred_element_type=jnp.float32) + bin_ref[...]
    in_embed = _gelu(_bmm(a, wina_ref[...]) + lxm_in[:, None, :])  # [N, BL, H]

    for g_idx, o_ref in zip(range(3), (gr_ref, gz_ref, gn_ref)):
        wie, wia, wil, bih = gate_w[4 * g_idx:4 * g_idx + 4]
        lx = jnp.dot(lxm, wil[...],
                     preferred_element_type=jnp.float32) + bih[...]
        o_ref[0] = (_bmm(in_embed, wie[...]) + _bmm(a, wia[...])
                    + lx[:, None, :])                        # [N, BL, H]


def audio_encoder_gi(kp, aud_blk, lxm_seq, BL):
    Bt, N, _, Cin = aud_blk.shape
    Bm2 = Bt - 2
    Dl = lxm_seq.shape[-1]
    H = kp["dec_b_in"].shape[-1]
    Ch = kp["ae_b0"].shape[-1]
    Lp = (3 * BL - 10) + 2

    weights = [kp["ae_w0c"], kp["ae_b0"], kp["ae_w1c"], kp["ae_b1"],
               kp["ae_w2c"], kp["ae_b2"], kp["ae_w3"], kp["ae_b3"],
               kp["ae_ln_g"], kp["ae_ln_b"],
               kp["dec_w_in_a"], kp["dec_w_in_l"], kp["dec_b_in"]]
    weights += kp["gru_l0_in"]

    gi_spec = pl.BlockSpec((1, N, BL, H), lambda b: (b, 0, 0, 0))
    gi_shape = jax.ShapeDtypeStruct((Bm2, N, BL, H), jnp.float32)

    kern = functools.partial(_encoder_gi_kernel, BL=BL)
    return pl.pallas_call(
        kern,
        grid=(Bm2,),
        in_specs=[pl.BlockSpec((1, N, BL, Cin), lambda b: (b, 0, 0, 0)),
                  pl.BlockSpec((1, N, BL, Cin), lambda b: (b + 1, 0, 0, 0)),
                  pl.BlockSpec((1, N, BL, Cin), lambda b: (b + 2, 0, 0, 0)),
                  pl.BlockSpec((1, N, Dl), lambda b: (b, 0, 0))]
                 + [_const_spec(w) for w in weights],
        out_specs=[gi_spec, gi_spec, gi_spec],
        out_shape=(gi_shape, gi_shape, gi_shape),
        scratch_shapes=[pltpu.VMEM((N, 3 * BL, Cin), jnp.float32),
                        pltpu.VMEM((N, Lp, Ch), jnp.float32)],
        compiler_params=pltpu.CompilerParams(
            dimension_semantics=("parallel",)),
    )(aud_blk, aud_blk, aud_blk, lxm_seq, *weights)


# ----------------------------------------------------------------------------
# GRUDecoder recurrence: one grid step per BL-frame block, cell state carried
# in VMEM scratch; LayerNorm + prediction head applied once per block.
# ----------------------------------------------------------------------------
def _decoder_kernel(*refs, depth, BL):
    gr_ref, gz_ref, gn_ref, h0_ref = refs[:4]
    nlw = 6 + 12 * (depth - 1)
    lw = refs[4:4 + nlw]
    lng_ref, lnb_ref, wp_ref, bp_ref = refs[4 + nlw:8 + nlw]
    out_ref, cell_ref, hbuf_ref = refs[8 + nlw:11 + nlw]

    N = h0_ref.shape[1]

    @pl.when(pl.program_id(0) == 0)
    def _():
        cell_ref[...] = h0_ref[...]

    # hoist all weight loads out of the timestep loop
    whh0 = [lw[g][...] for g in range(3)]
    bhh0 = [lw[3 + g][...] for g in range(3)]
    deep = []
    for p_ in range(1, depth):
        base = 6 + 12 * (p_ - 1)
        wih = [lw[base + g][...] for g in range(3)]
        bih = [lw[base + 3 + g][...] for g in range(3)]
        whh = [lw[base + 6 + g][...] for g in range(3)]
        bhh = [lw[base + 9 + g][...] for g in range(3)]
        deep.append((wih, bih, whh, bhh))

    gr = gr_ref[0]                    # [BL, N, H]
    gz = gz_ref[0]
    gn = gn_ref[0]

    hs = [cell_ref[p_] for p_ in range(depth)]

    def gru_gates(gi_r, gi_z, gi_n, h, whh, bhh):
        gh_r = jnp.dot(h, whh[0], preferred_element_type=jnp.float32) + bhh[0]
        gh_z = jnp.dot(h, whh[1], preferred_element_type=jnp.float32) + bhh[1]
        gh_n = jnp.dot(h, whh[2], preferred_element_type=jnp.float32) + bhh[2]
        r = jax.nn.sigmoid(gi_r + gh_r)
        z = jax.nn.sigmoid(gi_z + gh_z)
        n = jnp.tanh(gi_n + r * gh_n)
        return (1.0 - z) * n + z * h

    for f in range(BL):
        hs[0] = gru_gates(gr[f], gz[f], gn[f], hs[0], whh0, bhh0)
        x = hs[0]
        for p_, (wih, bih, whh, bhh) in enumerate(deep, start=1):
            gi_r = jnp.dot(x, wih[0], preferred_element_type=jnp.float32) + bih[0]
            gi_z = jnp.dot(x, wih[1], preferred_element_type=jnp.float32) + bih[1]
            gi_n = jnp.dot(x, wih[2], preferred_element_type=jnp.float32) + bih[2]
            hs[p_] = gru_gates(gi_r, gi_z, gi_n, hs[p_], whh, bhh)
            x = hs[p_]
        hbuf_ref[f * N:(f + 1) * N, :] = x

    for p_ in range(depth):
        cell_ref[p_] = hs[p_]

    # hoisted LayerNorm + prediction head on the whole block [BL*N, H]
    h_all = _layernorm(hbuf_ref[...], lng_ref[...], lnb_ref[...])
    out_ref[0] = (jnp.dot(h_all, wp_ref[...],
                          preferred_element_type=jnp.float32) + bp_ref[...])


def gru_decoder(kp, gi_r, gi_z, gi_n, cell0, BL, depth):
    # frame-major layout so the kernel indexes frames on the leading axis
    gi_r = jnp.transpose(gi_r, (0, 2, 1, 3))     # [B-2, BL, N, H]
    gi_z = jnp.transpose(gi_z, (0, 2, 1, 3))
    gi_n = jnp.transpose(gi_n, (0, 2, 1, 3))
    Bm2, _, N, H = gi_r.shape
    O = kp["dec_w_pred"].shape[-1]

    lw = []
    lw += kp["gru_whh"][0] + kp["gru_bhh"][0]
    for p_ in range(1, depth):
        lw += (kp["gru_wih"][p_ - 1] + kp["gru_bih"][p_ - 1]
               + kp["gru_whh"][p_] + kp["gru_bhh"][p_])
    tail = [kp["dec_ln_g"], kp["dec_ln_b"], kp["dec_w_pred"], kp["dec_b_pred"]]

    gi_spec = pl.BlockSpec((1, BL, N, H), lambda b: (b, 0, 0, 0))
    kern = functools.partial(_decoder_kernel, depth=depth, BL=BL)
    return pl.pallas_call(
        kern,
        grid=(Bm2,),
        in_specs=[gi_spec, gi_spec, gi_spec, _const_spec(cell0)]
                 + [_const_spec(w) for w in lw + tail],
        out_specs=pl.BlockSpec((1, BL * N, O), lambda b: (b, 0, 0)),
        out_shape=jax.ShapeDtypeStruct((Bm2, BL * N, O), jnp.float32),
        scratch_shapes=[pltpu.VMEM((depth, N, H), jnp.float32),
                        pltpu.VMEM((BL * N, H), jnp.float32)],
        compiler_params=pltpu.CompilerParams(
            dimension_semantics=("arbitrary",)),
    )(gi_r, gi_z, gi_n, cell0, *lw, *tail)


# ----------------------------------------------------------------------------
# MotionGenerator_RNN forward (glue)
# ----------------------------------------------------------------------------
def motion_generator_forward(kp, aud, lxm, *, rnn_depth, rnn_hid):
    # aud: [N, aud_dim, L] ; lxm: [N, lxm_dim, B]  (PyTorch layouts)
    N, Cin, L = aud.shape
    B = lxm.shape[-1]
    BL = L // B
    assert (3 * BL - 12) // 2 + 1 >= BL, "audio block too short for conv stack"

    cell0 = cell_state_init(kp, lxm[:, :, 0], rnn_depth, rnn_hid)  # [P, N, H]

    # [N, Cin, L] -> [B, N, BL, Cin]  (layout plumbing only; the 3x-overlapping
    # windows are never materialized -- three shifted BlockSpecs read them).
    aud_blk = jnp.transpose(
        jnp.transpose(aud, (0, 2, 1)).reshape(N, B, BL, Cin), (1, 0, 2, 3))
    lxm_seq = jnp.transpose(lxm[:, :, 1:B - 1], (2, 0, 1))         # [B-2, N, Dl]

    gi_r, gi_z, gi_n = audio_encoder_gi(kp, aud_blk, lxm_seq, BL)

    mo = gru_decoder(kp, gi_r, gi_z, gi_n, cell0, BL, rnn_depth)   # [B-2, BL*N, O]
    Bm2 = B - 2
    O = mo.shape[-1]
    mo = mo.reshape(Bm2 * BL, N, O)                                # t = b*BL + f
    return jnp.transpose(mo, (1, 2, 0))                            # [N, O, T]


# ----------------------------------------------------------------------------
# parameter construction (matches module __init__ shapes / init rules) and
# wrapper-side layout plumbing (im2col weights, per-gate splits).
# ----------------------------------------------------------------------------
def init_params(key, aud_dim, aud_hid, aud_embed, lxm_dim, rnn_hid, rnn_out,
                rnn_depth):
    keys = iter(jax.random.split(key, 64))

    def xavier(shape, fan_in, fan_out):
        bound = math.sqrt(6.0 / (fan_in + fan_out))
        return jax.random.uniform(next(keys), shape, jnp.float32, -bound, bound)

    def linear(in_dim, out_dim):
        return (xavier((in_dim, out_dim), in_dim, out_dim),
                jnp.zeros((1, out_dim), jnp.float32))

    def conv(k, cin, cout):
        return (xavier((k, cin, cout), cin * k, cout * k),
                jnp.zeros((1, cout), jnp.float32))

    p = {}
    # AudioEncoder_Conv1d
    p["ae_w0"], p["ae_b0"] = conv(7, aud_dim, aud_hid)
    p["ae_w1"], p["ae_b1"] = conv(5, aud_hid, aud_hid)
    p["ae_w2"], p["ae_b2"] = conv(4, aud_hid, aud_embed)
    p["ae_w3"], p["ae_b3"] = linear(aud_embed, aud_embed)
    p["ae_ln_g"] = jnp.ones((1, aud_embed), jnp.float32)
    p["ae_ln_b"] = jnp.zeros((1, aud_embed), jnp.float32)
    # CellStateInitializer
    p["csi_w0"], p["csi_b0"] = linear(lxm_dim, rnn_hid)
    p["csi_w1"], p["csi_b1"] = linear(rnn_hid, rnn_hid)
    p["csi_w2"], p["csi_b2"] = linear(rnn_hid, rnn_hid * rnn_depth)
    # GRUDecoder.embed_in
    in_dim = aud_embed + lxm_dim
    p["dec_w_in"], p["dec_b_in"] = linear(in_dim, rnn_hid)
    # GRU (PyTorch default uniform init; gate order r, z, n along columns).
    kg = 1.0 / math.sqrt(rnn_hid)
    gru_u = lambda shape: jax.random.uniform(next(keys), shape, jnp.float32,
                                             -kg, kg)
    p["gru_w_ih"] = ([gru_u((in_dim + rnn_hid, 3 * rnn_hid))]
                     + [gru_u((rnn_hid, 3 * rnn_hid))
                        for _ in range(rnn_depth - 1)])
    p["gru_w_hh"] = [gru_u((rnn_hid, 3 * rnn_hid)) for _ in range(rnn_depth)]
    p["gru_b_ih"] = [gru_u((1, 3 * rnn_hid)) for _ in range(rnn_depth)]
    p["gru_b_hh"] = [gru_u((1, 3 * rnn_hid)) for _ in range(rnn_depth)]
    # GRUDecoder norm + head
    p["dec_ln_g"] = jnp.ones((1, rnn_hid), jnp.float32)
    p["dec_ln_b"] = jnp.zeros((1, rnn_hid), jnp.float32)
    p["dec_w_pred"], p["dec_b_pred"] = linear(rnn_hid, rnn_out)
    return p


def prepare_params(p):
    """Free wrapper-side layout plumbing: im2col conv weights and pre-split
    linear / GRU weights per gate so kernels never slice lanes at runtime."""
    E = p["ae_w3"].shape[0]
    H = p["dec_b_in"].shape[-1]
    depth = len(p["gru_w_hh"])

    kp = dict(p)
    # conv weights -> [K*Cin, Cout] (rows k-major, matching in-kernel im2col)
    kp["ae_w0c"] = p["ae_w0"].reshape(-1, p["ae_w0"].shape[-1])
    kp["ae_w1c"] = p["ae_w1"].reshape(-1, p["ae_w1"].shape[-1])
    kp["ae_w2c"] = p["ae_w2"].reshape(-1, p["ae_w2"].shape[-1])
    # embed_in split by input rows (aud | lxm)
    kp["dec_w_in_a"] = p["dec_w_in"][:E]
    kp["dec_w_in_l"] = p["dec_w_in"][E:]
    # GRU layer-0 input weights: split by rows (in_embed | aud | lxm) and gate
    w_ih0, b_ih0 = p["gru_w_ih"][0], p["gru_b_ih"][0]
    gate0 = []
    for g in range(3):
        c = slice(g * H, (g + 1) * H)
        gate0 += [w_ih0[:H, c], w_ih0[H:H + E, c], w_ih0[H + E:, c],
                  b_ih0[:, c]]
    kp["gru_l0_in"] = gate0
    # per-layer hidden-hidden (all layers) and input-hidden (layers >= 1)
    split3 = lambda w: [w[:, g * H:(g + 1) * H] for g in range(3)]
    kp["gru_whh"] = [split3(p["gru_w_hh"][i]) for i in range(depth)]
    kp["gru_bhh"] = [split3(p["gru_b_hh"][i]) for i in range(depth)]
    kp["gru_wih"] = [split3(p["gru_w_ih"][i]) for i in range(1, depth)]
    kp["gru_bih"] = [split3(p["gru_b_ih"][i]) for i in range(1, depth)]
    return kp


if __name__ == "__main__":
    aud_dim, aud_hid, aud_embed_dim = 4, 16, 16
    lxm_dim, rnn_hid, rnn_out, rnn_depth = 6, 32, 8, 2
    N, B, BL = 2, 4, 10          # BL=10 -> conv stack emits exactly BL frames
    L = B * BL

    key = jax.random.PRNGKey(0)
    kparams, ka, kl = jax.random.split(key, 3)
    raw = init_params(kparams, aud_dim, aud_hid, aud_embed_dim, lxm_dim,
                      rnn_hid, rnn_out, rnn_depth)
    params = prepare_params(raw)
    aud = jax.random.normal(ka, (N, aud_dim, L), jnp.float32)
    lxm = jax.random.normal(kl, (N, lxm_dim, B), jnp.float32)

    out = motion_generator_forward(params, aud, lxm,
                                   rnn_depth=rnn_depth, rnn_hid=rnn_hid)
    jax.block_until_ready(out)
    assert out.shape == (N, rnn_out, (B - 2) * BL), out.shape
    print("KERNEL_OK")
</pallas_src>

<mosaic_0001>
module attributes {stable_mosaic.version = 11 : i64} {
  func.func @_cell_init_kernel(%arg0: memref<2x6xf32, #tpu.memory_space<vmem>>, %arg1: memref<6x32xf32, #tpu.memory_space<vmem>>, %arg2: memref<1x32xf32, #tpu.memory_space<vmem>>, %arg3: memref<32x32xf32, #tpu.memory_space<vmem>>, %arg4: memref<1x32xf32, #tpu.memory_space<vmem>>, %arg5: memref<32x64xf32, #tpu.memory_space<vmem>>, %arg6: memref<1x64xf32, #tpu.memory_space<vmem>>, %arg7: memref<2x64xf32, #tpu.memory_space<vmem>>) attributes {dimension_semantics = [], scalar_prefetch = 0 : i64, scratch_operands = 0 : i64, tpu.core_type = #tpu.core_type<tc>} {
    %c0 = arith.constant 0 : index
    %c0_0 = arith.constant 0 : index
    %0 = vector.load %arg0[%c0, %c0_0] : memref<2x6xf32, #tpu.memory_space<vmem>>, vector<2x6xf32>
    %c0_1 = arith.constant 0 : index
    %c0_2 = arith.constant 0 : index
    %1 = vector.load %arg1[%c0_1, %c0_2] : memref<6x32xf32, #tpu.memory_space<vmem>>, vector<6x32xf32>
    %cst = arith.constant dense<0.000000e+00> : vector<2x32xf32>
    %2 = tpu.matmul %0, %1, %cst {dimension_numbers = #tpu.dot_dimension_numbers<[1], [0], [0], [1], [0, 0, 1, 1], [], []>} : vector<2x6xf32>, vector<6x32xf32>, vector<2x32xf32> -> vector<2x32xf32>
    %c0_3 = arith.constant 0 : index
    %c0_4 = arith.constant 0 : index
    %3 = vector.load %arg2[%c0_3, %c0_4] : memref<1x32xf32, #tpu.memory_space<vmem>>, vector<1x32xf32>
    %4 = vector.broadcast %3 : vector<1x32xf32> to vector<2x32xf32>
    %5 = arith.addf %2, %4 : vector<2x32xf32>
    %cst_5 = arith.constant 0.707106769 : f32
    %6 = vector.broadcast %cst_5 : f32 to vector<2x32xf32>
    %7 = arith.mulf %5, %6 : vector<2x32xf32>
    %cst_6 = arith.constant 0.000000e+00 : f32
    %8 = vector.broadcast %cst_6 : f32 to vector<2x32xf32>
    %9 = arith.cmpf oge, %7, %8 : vector<2x32xf32>
    %cst_7 = arith.constant 1.000000e+00 : f32
    %cst_8 = arith.constant -1.000000e+00 : f32
    %10 = vector.broadcast %cst_7 : f32 to vector<2x32xf32>
    %11 = vector.broadcast %cst_8 : f32 to vector<2x32xf32>
    %12 = arith.select %9, %10, %11 : vector<2x32xi1>, vector<2x32xf32>
    %13 = math.absf %7 : vector<2x32xf32>
    %cst_9 = arith.constant 0.327591091 : f32
    %14 = vector.broadcast %cst_9 : f32 to vector<2x32xf32>
    %15 = arith.mulf %14, %13 : vector<2x32xf32>
    %cst_10 = arith.constant 1.000000e+00 : f32
    %16 = vector.broadcast %cst_10 : f32 to vector<2x32xf32>
    %17 = arith.addf %16, %15 : vector<2x32xf32>
    %18 = tpu.reciprocal %17 {approx = true} : vector<2x32xf32> -> vector<2x32xf32>
    %cst_11 = arith.constant 1.06140542 : f32
    %19 = vector.broadcast %cst_11 : f32 to vector<2x32xf32>
    %20 = arith.mulf %19, %18 : vector<2x32xf32>
    %cst_12 = arith.constant -1.45315206 : f32
    %21 = vector.broadcast %cst_12 : f32 to vector<2x32xf32>
    %22 = arith.addf %20, %21 : vector<2x32xf32>
    %23 = arith.mulf %22, %18 : vector<2x32xf32>
    %cst_13 = arith.constant 1.42141378 : f32
    %24 = vector.broadcast %cst_13 : f32 to vector<2x32xf32>
    %25 = arith.addf %23, %24 : vector<2x32xf32>
    %26 = arith.mulf %25, %18 : vector<2x32xf32>
    %cst_14 = arith.constant -0.284496725 : f32
    %27 = vector.broadcast %cst_14 : f32 to vector<2x32xf32>
    %28 = arith.addf %26, %27 : vector<2x32xf32>
    %29 = arith.mulf %28, %18 : vector<2x32xf32>
    %cst_15 = arith.constant 0.254829586 : f32
    %30 = vector.broadcast %cst_15 : f32 to vector<2x32xf32>
    %31 = arith.addf %29, %30 : vector<2x32xf32>
    %32 = arith.mulf %31, %18 : vector<2x32xf32>
    %cst_16 = arith.constant 0.000000e+00 : f32
    %33 = vector.broadcast %cst_16 : f32 to vector<2x32xf32>
    %34 = arith.subf %33, %13 : vector<2x32xf32>
    %35 = arith.mulf %34, %13 : vector<2x32xf32>
    %36 = math.exp %35 : vector<2x32xf32>
    %37 = arith.mulf %32, %36 : vector<2x32xf32>
    %cst_17 = arith.constant 1.000000e+00 : f32
    %38 = vector.broadcast %cst_17 : f32 to vector<2x32xf32>
    %39 = arith.subf %38, %37 : vector<2x32xf32>
    %40 = arith.mulf %12, %39 : vector<2x32xf32>
    %cst_18 = arith.constant 5.000000e-01 : f32
    %41 = vector.broadcast %cst_18 : f32 to vector<2x32xf32>
    %42 = arith.mulf %41, %5 : vector<2x32xf32>
    %cst_19 = arith.constant 1.000000e+00 : f32
    %43 = vector.broadcast %cst_19 : f32 to vector<2x32xf32>
    %44 = arith.addf %43, %40 : vector<2x32xf32>
    %45 = arith.mulf %42, %44 : vector<2x32xf32>
    %c0_20 = arith.constant 0 : index
    %c0_21 = arith.constant 0 : index
    %46 = vector.load %arg3[%c0_20, %c0_21] : memref<32x32xf32, #tpu.memory_space<vmem>>, vector<32x32xf32>
    %cst_22 = arith.constant dense<0.000000e+00> : vector<2x32xf32>
    %47 = tpu.matmul %45, %46, %cst_22 {dimension_numbers = #tpu.dot_dimension_numbers<[1], [0], [0], [1], [0, 0, 1, 1], [], []>} : vector<2x32xf32>, vector<32x32xf32>, vector<2x32xf32> -> vector<2x32xf32>
    %c0_23 = arith.constant 0 : index
    %c0_24 = arith.constant 0 : index
    %48 = vector.load %arg4[%c0_23, %c0_24] : memref<1x32xf32, #tpu.memory_space<vmem>>, vector<1x32xf32>
    %49 = vector.broadcast %48 : vector<1x32xf32> to vector<2x32xf32>
    %50 = arith.addf %47, %49 : vector<2x32xf32>
    %cst_25 = arith.constant 0.707106769 : f32
    %51 = vector.broadcast %cst_25 : f32 to vector<2x32xf32>
    %52 = arith.mulf %50, %51 : vector<2x32xf32>
    %cst_26 = arith.constant 0.000000e+00 : f32
    %53 = vector.broadcast %cst_26 : f32 to vector<2x32xf32>
    %54 = arith.cmpf oge, %52, %53 : vector<2x32xf32>
    %cst_27 = arith.constant 1.000000e+00 : f32
    %cst_28 = arith.constant -1.000000e+00 : f32
    %55 = vector.broadcast %cst_27 : f32 to vector<2x32xf32>
    %56 = vector.broadcast %cst_28 : f32 to vector<2x32xf32>
    %57 = arith.select %54, %55, %56 : vector<2x32xi1>, vector<2x32xf32>
    %58 = math.absf %52 : vector<2x32xf32>
    %cst_29 = arith.constant 0.327591091 : f32
    %59 = vector.broadcast %cst_29 : f32 to vector<2x32xf32>
    %60 = arith.mulf %59, %58 : vector<2x32xf32>
    %cst_30 = arith.constant 1.000000e+00 : f32
    %61 = vector.broadcast %cst_30 : f32 to vector<2x32xf32>
    %62 = arith.addf %61, %60 : vector<2x32xf32>
    %63 = tpu.reciprocal %62 {approx = true} : vector<2x32xf32> -> vector<2x32xf32>
    %cst_31 = arith.constant 1.06140542 : f32
    %64 = vector.broadcast %cst_31 : f32 to vector<2x32xf32>
    %65 = arith.mulf %64, %63 : vector<2x32xf32>
    %cst_32 = arith.constant -1.45315206 : f32
    %66 = vector.broadcast %cst_32 : f32 to vector<2x32xf32>
    %67 = arith.addf %65, %66 : vector<2x32xf32>
    %68 = arith.mulf %67, %63 : vector<2x32xf32>
    %cst_33 = arith.constant 1.42141378 : f32
    %69 = vector.broadcast %cst_33 : f32 to vector<2x32xf32>
    %70 = arith.addf %68, %69 : vector<2x32xf32>
    %71 = arith.mulf %70, %63 : vector<2x32xf32>
    %cst_34 = arith.constant -0.284496725 : f32
    %72 = vector.broadcast %cst_34 : f32 to vector<2x32xf32>
    %73 = arith.addf %71, %72 : vector<2x32xf32>
    %74 = arith.mulf %73, %63 : vector<2x32xf32>
    %cst_35 = arith.constant 0.254829586 : f32
    %75 = vector.broadcast %cst_35 : f32 to vector<2x32xf32>
    %76 = arith.addf %74, %75 : vector<2x32xf32>
    %77 = arith.mulf %76, %63 : vector<2x32xf32>
    %cst_36 = arith.constant 0.000000e+00 : f32
    %78 = vector.broadcast %cst_36 : f32 to vector<2x32xf32>
    %79 = arith.subf %78, %58 : vector<2x32xf32>
    %80 = arith.mulf %79, %58 : vector<2x32xf32>
    %81 = math.exp %80 : vector<2x32xf32>
    %82 = arith.mulf %77, %81 : vector<2x32xf32>
    %cst_37 = arith.constant 1.000000e+00 : f32
    %83 = vector.broadcast %cst_37 : f32 to vector<2x32xf32>
    %84 = arith.subf %83, %82 : vector<2x32xf32>
    %85 = arith.mulf %57, %84 : vector<2x32xf32>
    %cst_38 = arith.constant 5.000000e-01 : f32
    %86 = vector.broadcast %cst_38 : f32 to vector<2x32xf32>
    %87 = arith.mulf %86, %50 : vector<2x32xf32>
    %cst_39 = arith.constant 1.000000e+00 : f32
    %88 = vector.broadcast %cst_39 : f32 to vector<2x32xf32>
    %89 = arith.addf %88, %85 : vector<2x32xf32>
    %90 = arith.mulf %87, %89 : vector<2x32xf32>
    %c0_40 = arith.constant 0 : index
    %c0_41 = arith.constant 0 : index
    %91 = vector.load %arg5[%c0_40, %c0_41] : memref<32x64xf32, #tpu.memory_space<vmem>>, vector<32x64xf32>
    %cst_42 = arith.constant dense<0.000000e+00> : vector<2x64xf32>
    %92 = tpu.matmul %90, %91, %cst_42 {dimension_numbers = #tpu.dot_dimension_numbers<[1], [0], [0], [1], [0, 0, 1, 1], [], []>} : vector<2x32xf32>, vector<32x64xf32>, vector<2x64xf32> -> vector<2x64xf32>
    %c0_43 = arith.constant 0 : index
    %c0_44 = arith.constant 0 : index
    %93 = vector.load %arg6[%c0_43, %c0_44] : memref<1x64xf32, #tpu.memory_space<vmem>>, vector<1x64xf32>
    %94 = vector.broadcast %93 : vector<1x64xf32> to vector<2x64xf32>
    %95 = arith.addf %92, %94 : vector<2x64xf32>
    %c0_45 = arith.constant 0 : index
    %c0_46 = arith.constant 0 : index
    %96 = vector.load %arg7[%c0_45, %c0_46] : memref<2x64xf32, #tpu.memory_space<vmem>>, vector<2x64xf32>
    tpu.vector_store %arg7[%c0_45, %c0_46], %95 {strides = array<i32>} : memref<2x64xf32, #tpu.memory_space<vmem>>, vector<2x64xf32>,
    return
  }
}

</mosaic_0001>

<llo_original>
// kernel: tpu_custom_call.1
$region0: #{tpu_custom_call.1}
  #allocation0 [shape = 'u32[]', space=smem, size = 0x4, offset = 0x4, fixed_abs, tag = 'smem constant byte address 0x4 - core index']
  #allocation1 [shape = 'u32[144,128]{1,0:T(1,128)}', space=vmem, size = 0x12000, scoped, tag = 'internal scratch']
  %s0 = inlined_call_operand.hbm [shape: f32[2,6], index: 0, kind: input, shape index: {}]
  %s1 = inlined_call_operand.hbm [shape: f32[6,32], index: 1, kind: input, shape index: {}]
  %s2 = inlined_call_operand.vmem [shape: f32[1,32], index: 2, kind: input, shape index: {}]
  %s3 = inlined_call_operand.hbm [shape: f32[32,32], index: 3, kind: input, shape index: {}]
  %s4 = inlined_call_operand.vmem [shape: f32[1,32], index: 4, kind: input, shape index: {}]
  %s5 = inlined_call_operand.hbm [shape: f32[32,64], index: 5, kind: input, shape index: {}]
  %s6 = inlined_call_operand.vmem [shape: f32[1,64], index: 6, kind: input, shape index: {}]
  %s7 = inlined_call_operand.hbm [shape: f32[2,64], index: 7, kind: output, shape index: {}]
  %s8 = sld [smem:[#allocation0]]
  $region54: #{tpu_custom_call.1} parent=0
    _
  %s10 = ssub.s32 1, %s8
  %s11 = scalar_select 0, %s10, %s8
  $region1: #{tpu_custom_call.1} parent=0
    #allocation2 [shape = 'u8[1024]{0}', space=vmem, size = 0x400, scoped, tag = 'input window, operand 0, single buffered']
    #allocation3 [shape = 's32[1]{0}', space=sflag, size = 0x4, scoped, tag = 'scoped memory for tpu_custom_call.1']
    #allocation4 [shape = 's32[1]{0}', space=sflag, size = 0x4, scoped, tag = 'scoped memory for tpu_custom_call.1']
    #allocation5 [shape = 'u8[4096]{0}', space=vmem, size = 0x1000, scoped, tag = 'input window, operand 1, single buffered']
    #allocation6 [shape = 's32[1]{0}', space=sflag, size = 0x4, scoped, tag = 'scoped memory for tpu_custom_call.1']
    #allocation7 [shape = 'u8[16384]{0}', space=vmem, size = 0x4000, scoped, tag = 'input window, operand 3, single buffered']
    #allocation8 [shape = 'u8[16384]{0}', space=vmem, size = 0x4000, scoped, tag = 'input window, operand 5, single buffered']
    #allocation9 [shape = 's32[1]{0}', space=sflag, size = 0x4, scoped, tag = 'scoped memory for tpu_custom_call.1']
    #allocation10 [shape = 'u8[1024]{0}', space=vmem, size = 0x400, scoped, tag = 'output window, operand 0, single buffered']
    %12 = vsyncpa [#allocation3], 0
    %13 = vsyncpa [#allocation6], 0
    %14 = vsyncpa [#allocation9], 0
    %15 = vsyncpa [#allocation4], 0
    // Predicated region
    $region2: #{tpu_custom_call.1} parent=1 // pred_check
      _
    $region3: #{tpu_custom_call.1} parent=1 // pred_check_branch
      %17 = sbr.rel (0) target = $region5
    $region4: #{tpu_custom_call.1} parent=1 // pred_region
      %s19 = ssub.s32 32, 32
      %20 = vsyncadd [#allocation3], %s19
      %s22 = sshll.u32 [#allocation2], 4
      %s23 = int_to_ptr.vmem [resolvable:$true] %s22
      %25 = dma.hbm_to_vmem [thread:$0]  %s0, 32, %s23, [#allocation3]
    $region5: #{tpu_custom_call.1} parent=1 // pred_fallthru
      _
    // Predicated region
    $region6: #{tpu_custom_call.1} parent=1 // pred_check
      _
    $region7: #{tpu_custom_call.1} parent=1 // pred_check_branch
      %27 = sbr.rel (0) target = $region9
    $region8: #{tpu_custom_call.1} parent=1 // pred_region
      %s29 = ssub.s32 128, 128
      %30 = vsyncadd [#allocation6], %s29
      %s32 = sshll.u32 [#allocation5], 4
      %s33 = int_to_ptr.vmem [resolvable:$true] %s32
      %35 = dma.hbm_to_vmem [thread:$0]  %s1, 128, %s33, [#allocation6]
    $region9: #{tpu_custom_call.1} parent=1 // pred_fallthru
      _
    // Predicated region
    $region10: #{tpu_custom_call.1} parent=1 // pred_check
      _
    $region11: #{tpu_custom_call.1} parent=1 // pred_check_branch
      %37 = sbr.rel (0) target = $region13
    $region12: #{tpu_custom_call.1} parent=1 // pred_region
      _
    $region13: #{tpu_custom_call.1} parent=1 // pred_fallthru
      _
    // Predicated region
    $region14: #{tpu_custom_call.1} parent=1 // pred_check
      _
    $region15: #{tpu_custom_call.1} parent=1 // pred_check_branch
      %39 = sbr.rel (0) target = $region17
    $region16: #{tpu_custom_call.1} parent=1 // pred_region
      %s41 = ssub.s32 512, 512
      %42 = vsyncadd [#allocation6], %s41
      %s43 = sshll.u32 [#allocation7], 4
      %s44 = int_to_ptr.vmem [resolvable:$true] %s43
      %49 = dma.hbm_to_vmem [thread:$0]  %s3, 512, %s44, [#allocation6], 128, 128, 8
    $region17: #{tpu_custom_call.1} parent=1 // pred_fallthru
      _
    // Predicated region
    $region18: #{tpu_custom_call.1} parent=1 // pred_check
      _
    $region19: #{tpu_custom_call.1} parent=1 // pred_check_branch
      %51 = sbr.rel (0) target = $region21
    $region20: #{tpu_custom_call.1} parent=1 // pred_region
      _
    $region21: #{tpu_custom_call.1} parent=1 // pred_fallthru
      _
    // Predicated region
    $region22: #{tpu_custom_call.1} parent=1 // pred_check
      _
    $region23: #{tpu_custom_call.1} parent=1 // pred_check_branch
      %53 = sbr.rel (0) target = $region25
    $region24: #{tpu_custom_call.1} parent=1 // pred_region
      %s55 = ssub.s32 512, 512
      %56 = vsyncadd [#allocation9], %s55
      %s57 = sshll.u32 [#allocation8], 4
      %s58 = int_to_ptr.vmem [resolvable:$true] %s57
      %63 = dma.hbm_to_vmem [thread:$0]  %s5, 512, %s58, [#allocation9], 128, 128, 8
    $region25: #{tpu_custom_call.1} parent=1 // pred_fallthru
      _
    // Predicated region
    $region26: #{tpu_custom_call.1} parent=1 // pred_check
      _
    $region27: #{tpu_custom_call.1} parent=1 // pred_check_branch
      %65 = sbr.rel (0) target = $region29
    $region28: #{tpu_custom_call.1} parent=1 // pred_region
      _
    $region29: #{tpu_custom_call.1} parent=1 // pred_fallthru
      _
    // Predicated region
    $region30: #{tpu_custom_call.1} parent=1 // pred_check
      _
    $region31: #{tpu_custom_call.1} parent=1 // pred_check_branch
      %67 = sbr.rel (0) target = $region33
    $region32: #{tpu_custom_call.1} parent=1 // pred_region
      %68 = dma.done [#allocation3], 32
    $region33: #{tpu_custom_call.1} parent=1 // pred_fallthru
      _
    // Predicated region
    $region34: #{tpu_custom_call.1} parent=1 // pred_check
      _
    $region35: #{tpu_custom_call.1} parent=1 // pred_check_branch
      %70 = sbr.rel (0) target = $region37
    $region36: #{tpu_custom_call.1} parent=1 // pred_region
      %71 = dma.done [#allocation6], 128
    $region37: #{tpu_custom_call.1} parent=1 // pred_fallthru
      _
    // Predicated region
    $region38: #{tpu_custom_call.1} parent=1 // pred_check
      _
    $region39: #{tpu_custom_call.1} parent=1 // pred_check_branch
      %73 = sbr.rel (0) target = $region41
    $region40: #{tpu_custom_call.1} parent=1 // pred_region
      %74 = dma.done [#allocation6], 512
    $region41: #{tpu_custom_call.1} parent=1 // pred_fallthru
      _
    // Predicated region
    $region42: #{tpu_custom_call.1} parent=1 // pred_check
      _
    $region43: #{tpu_custom_call.1} parent=1 // pred_check_branch
      %76 = sbr.rel (0) target = $region45
    $region44: #{tpu_custom_call.1} parent=1 // pred_region
      %77 = dma.done [#allocation9], 512
    $region45: #{tpu_custom_call.1} parent=1 // pred_fallthru
      _
    %v78 = vld [vmem:[#allocation2] sm:$0x3]
    %v79 = vld [vmem:[#allocation5] sm:$0x3f]
    %v80 = vld [vmem:[%s2] sm:$0x1]
    %v82 = vlaneseq
    %v83 = vshrl.u32 %v82, 7
    %v84 = vsub.s32 0, %v83
    %v85 = vrot.slane %v80, %v84
    %vm87 = vcmask 48128
    %v89 = vsel %vm87, %v78, 0
    %vm91 = vcmask 1045504
    %v93 = vsel %vm91, %v79, 0
    %95 = vmatprep.subr.mxu0 0.0
    %96 = vmatpush1.msra.mxu0 %v93
    %97 = vmatprep.subr.mxu0 0.0
    %98 = vmatpush1.msra.mxu0 0.0
    %99 = vmatprep.subr.mxu0 0.0
    %100 = vmatpush1.msra.mxu0 0.0
    %101 = vmatprep.subr.mxu0 0.0
    %102 = vmatpush1.msra.mxu0 0.0
    %103 = vmatprep.subr.mxu0 0.0
    %104 = vmatpush1.msra.mxu0 0.0
    %105 = vmatprep.subr.mxu0 0.0
    %106 = vmatpush1.msra.mxu0 0.0
    %107 = vmatprep.subr.mxu0 0.0
    %108 = vmatpush1.msra.mxu0 0.0
    %109 = vmatprep.subr.mxu0 0.0
    %110 = vmatpush1.msra.mxu0 0.0
    %111 = vmatprep.subr.mxu0 0.0
    %112 = vmatpush1.msra.mxu0 0.0
    %113 = vmatprep.subr.mxu0 0.0
    %114 = vmatpush1.msra.mxu0 0.0
    %115 = vmatprep.subr.mxu0 0.0
    %116 = vmatpush1.msra.mxu0 0.0
    %117 = vmatprep.subr.mxu0 0.0
    %118 = vmatpush1.msra.mxu0 0.0
    %119 = vmatprep.subr.mxu0 0.0
    %120 = vmatpush1.msra.mxu0 0.0
    %121 = vmatprep.subr.mxu0 0.0
    %122 = vmatpush1.msra.mxu0 0.0
    %123 = vmatprep.subr.mxu0 0.0
    %124 = vmatpush1.msra.mxu0 0.0
    %125 = vmatprep.subr.mxu0 0.0
    %126 = vmatpush1.msra.mxu0 0.0
    %127 = vmatprep.subr.mxu0 0.0
    %128 = vmatpush1.msra.mxu0 0.0
    %129 = vmatprep.subr.mxu0 0.0
    %130 = vmatpush1.msra.mxu0 0.0
    %131 = vmatprep.subr.mxu0 0.0
    %132 = vmatpush1.msra.mxu0 0.0
    %133 = vmatprep.subr.mxu0 0.0
    %134 = vmatpush1.msra.mxu0 0.0
    %135 = vmatprep.subr.mxu0 0.0
    %136 = vmatpush1.msra.mxu0 0.0
    %137 = vmatprep.subr.mxu0 0.0
    %138 = vmatpush1.msra.mxu0 0.0
    %139 = vmatprep.subr.mxu0 0.0
    %140 = vmatpush1.msra.mxu0 0.0
    %141 = vmatprep.subr.mxu0 0.0
    %142 = vmatpush1.msra.mxu0 0.0
    %143 = vmatprep.subr.mxu0 0.0
    %144 = vmatpush1.msra.mxu0 0.0
    %145 = vmatprep.subr.mxu0 0.0
    %146 = vmatpush1.msra.mxu0 0.0
    %147 = vmatprep.subr.mxu0 0.0
    %148 = vmatpush1.msra.mxu0 0.0
    %149 = vmatprep.subr.mxu0 0.0
    %150 = vmatpush1.msra.mxu0 0.0
    %151 = vmatprep.subr.mxu0 0.0
    %152 = vmatpush1.msra.mxu0 0.0
    %153 = vmatprep.subr.mxu0 0.0
    %154 = vmatpush1.msra.mxu0 0.0
    %155 = vmatprep.subr.mxu0 0.0
    %156 = vmatpush1.msra.mxu0 0.0
    %157 = vmatprep.subr.mxu0 0.0
    %158 = vmatpush1.msra.mxu0 0.0
    %159 = vmatprep.mubr.f32.mxu0 0.0
    %160 = vmatmul.mubr.f32.gmra.mrb[0].mxu0 %v89
    %v161 = vpop.f32.mrb[0].mxu0
    %v162 = vadd.f32 %v85, %v161
    %v163 = vpop.f32.mrb[0].mxu0
    %164 = vdwg.mxu0
    %v165 = vmul.f32 %v162, 0.70710677
    %vm166 = vcmp.ge.f32.partialorder %v165, 0.0
    %v167 = vsel %vm166, 1.0, -1.0
    %v168 = vand.u32 2147483647, %v165
    %v169 = vmul.f32 %v168, 0.3275911
    %v170 = vadd.f32 %v169, 1.0
    %v171 = vrcp.pop %v170
    %v172 = vmul.f32 %v171, 1.0614054
    %v173 = vadd.f32 %v172, -1.4531521
    %v174 = vmul.f32 %v173, %v171
    %v175 = vadd.f32 %v174, 1.4214138
    %v176 = vmul.f32 %v175, %v171
    %v177 = vadd.f32 %v176, -0.28449672
    %v178 = vmul.f32 %v177, %v171
    %v179 = vadd.f32 %v178, 0.2548296
    %v180 = vmul.f32 %v179, %v171
    %v181 = vsub.f32 0.0, %v168
    %v182 = vmul.f32 %v181, %v168
    %v183 = vmul.f32 %v182, 1.442695
    %v184 = vpow.pop %v183
    %v185 = vmul.f32 %v180, %v184
    %v186 = vsub.f32 1.0, %v185
    %v187 = vmul.f32 %v167, %v186
    %v188 = vmul.f32 %v162, 0.5
    %v189 = vadd.f32 %v187, 1.0
    %v190 = vmul.f32 %v188, %v189
    %v191 = vld [vmem:[#allocation7] sm:$0xff]
    %v192 = vld [vmem:[#allocation7 + $0x8] sm:$0xff]
    %v193 = vld [vmem:[#allocation7 + $0x10] sm:$0xff]
    %v194 = vld [vmem:[#allocation7 + $0x18] sm:$0xff]
    %v195 = vld [vmem:[%s4] sm:$0x1]
    %v197 = vlaneseq
    %v198 = vshrl.u32 %v197, 7
    %v199 = vsub.s32 0, %v198
    %v200 = vrot.slane %v195, %v199
    %vm202 = vcmask 261120
    %v204 = vsel %vm202, %v190, 0
    %206 = vmatprep.subr.mxu0 0.0
    %207 = vmatpush1.msra.mxu0 %v191
    %208 = vmatprep.subr.mxu0 0.0
    %209 = vmatpush1.msra.mxu0 %v192
    %210 = vmatprep.subr.mxu0 0.0
    %211 = vmatpush1.msra.mxu0 %v193
    %212 = vmatprep.subr.mxu0 0.0
    %213 = vmatpush1.msra.mxu0 %v194
    %214 = vmatprep.subr.mxu0 0.0
    %215 = vmatpush1.msra.mxu0 0.0
    %216 = vmatprep.subr.mxu0 0.0
    %217 = vmatpush1.msra.mxu0 0.0
    %218 = vmatprep.subr.mxu0 0.0
    %219 = vmatpush1.msra.mxu0 0.0
    %220 = vmatprep.subr.mxu0 0.0
    %221 = vmatpush1.msra.mxu0 0.0
    %222 = vmatprep.subr.mxu0 0.0
    %223 = vmatpush1.msra.mxu0 0.0
    %224 = vmatprep.subr.mxu0 0.0
    %225 = vmatpush1.msra.mxu0 0.0
    %226 = vmatprep.subr.mxu0 0.0
    %227 = vmatpush1.msra.mxu0 0.0
    %228 = vmatprep.subr.mxu0 0.0
    %229 = vmatpush1.msra.mxu0 0.0
    %230 = vmatprep.subr.mxu0 0.0
    %231 = vmatpush1.msra.mxu0 0.0
    %232 = vmatprep.subr.mxu0 0.0
    %233 = vmatpush1.msra.mxu0 0.0
    %234 = vmatprep.subr.mxu0 0.0
    %235 = vmatpush1.msra.mxu0 0.0
    %236 = vmatprep.subr.mxu0 0.0
    %237 = vmatpush1.msra.mxu0 0.0
    %238 = vmatprep.subr.mxu0 0.0
    %239 = vmatpush1.msra.mxu0 0.0
    %240 = vmatprep.subr.mxu0 0.0
    %241 = vmatpush1.msra.mxu0 0.0
    %242 = vmatprep.subr.mxu0 0.0
    %243 = vmatpush1.msra.mxu0 0.0
    %244 = vmatprep.subr.mxu0 0.0
    %245 = vmatpush1.msra.mxu0 0.0
    %246 = vmatprep.subr.mxu0 0.0
    %247 = vmatpush1.msra.mxu0 0.0
    %248 = vmatprep.subr.mxu0 0.0
    %249 = vmatpush1.msra.mxu0 0.0
    %250 = vmatprep.subr.mxu0 0.0
    %251 = vmatpush1.msra.mxu0 0.0
    %252 = vmatprep.subr.mxu0 0.0
    %253 = vmatpush1.msra.mxu0 0.0
    %254 = vmatprep.subr.mxu0 0.0
    %255 = vmatpush1.msra.mxu0 0.0
    %256 = vmatprep.subr.mxu0 0.0
    %257 = vmatpush1.msra.mxu0 0.0
    %258 = vmatprep.subr.mxu0 0.0
    %259 = vmatpush1.msra.mxu0 0.0
    %260 = vmatprep.subr.mxu0 0.0
    %261 = vmatpush1.msra.mxu0 0.0
    %262 = vmatprep.subr.mxu0 0.0
    %263 = vmatpush1.msra.mxu0 0.0
    %264 = vmatprep.subr.mxu0 0.0
    %265 = vmatpush1.msra.mxu0 0.0
    %266 = vmatprep.subr.mxu0 0.0
    %267 = vmatpush1.msra.mxu0 0.0
    %268 = vmatprep.subr.mxu0 0.0
    %269 = vmatpush1.msra.mxu0 0.0
    %270 = vmatprep.mubr.f32.mxu0 0.0
    %271 = vmatmul.mubr.f32.gmra.mrb[0].mxu0 %v204
    %v272 = vpop.f32.mrb[0].mxu0
    %v273 = vadd.f32 %v200, %v272
    %v274 = vpop.f32.mrb[0].mxu0
    %275 = vdwg.mxu0
    %v276 = vmul.f32 %v273, 0.70710677
    %vm277 = vcmp.ge.f32.partialorder %v276, 0.0
    %v278 = vsel %vm277, 1.0, -1.0
    %v279 = vand.u32 2147483647, %v276
    %v280 = vmul.f32 %v279, 0.3275911
    %v281 = vadd.f32 %v280, 1.0
    %v282 = vrcp.pop %v281
    %v283 = vmul.f32 %v282, 1.0614054
    %v284 = vadd.f32 %v283, -1.4531521
    %v285 = vmul.f32 %v284, %v282
    %v286 = vadd.f32 %v285, 1.4214138
    %v287 = vmul.f32 %v286, %v282
    %v288 = vadd.f32 %v287, -0.28449672
    %v289 = vmul.f32 %v288, %v282
    %v290 = vadd.f32 %v289, 0.2548296
    %v291 = vmul.f32 %v290, %v282
    %v292 = vsub.f32 0.0, %v279
    %v293 = vmul.f32 %v292, %v279
    %v294 = vmul.f32 %v293, 1.442695
    %v295 = vpow.pop %v294
    %v296 = vmul.f32 %v291, %v295
    %v297 = vsub.f32 1.0, %v296
    %v298 = vmul.f32 %v278, %v297
    %v299 = vmul.f32 %v273, 0.5
    %v300 = vadd.f32 %v298, 1.0
    %v301 = vmul.f32 %v299, %v300
    %v302 = vld [vmem:[#allocation8] sm:$0xff]
    %v303 = vld [vmem:[#allocation8 + $0x8] sm:$0xff]
    %v304 = vld [vmem:[#allocation8 + $0x10] sm:$0xff]
    %v305 = vld [vmem:[#allocation8 + $0x18] sm:$0xff]
    %v306 = vld [vmem:[%s6] sm:$0x1]
    %v308 = vlaneseq
    %v309 = vshrl.u32 %v308, 7
    %v310 = vsub.s32 0, %v309
    %v311 = vrot.slane %v306, %v310
    %v314 = vsel %vm202, %v301, 0
    %316 = vmatprep.subr.mxu0 0.0
    %317 = vmatpush1.msra.mxu0 %v302
    %318 = vmatprep.subr.mxu0 0.0
    %319 = vmatpush1.msra.mxu0 %v303
    %320 = vmatprep.subr.mxu0 0.0
    %321 = vmatpush1.msra.mxu0 %v304
    %322 = vmatprep.subr.mxu0 0.0
    %323 = vmatpush1.msra.mxu0 %v305
    %324 = vmatprep.subr.mxu0 0.0
    %325 = vmatpush1.msra.mxu0 0.0
    %326 = vmatprep.subr.mxu0 0.0
    %327 = vmatpush1.msra.mxu0 0.0
    %328 = vmatprep.subr.mxu0 0.0
    %329 = vmatpush1.msra.mxu0 0.0
    %330 = vmatprep.subr.mxu0 0.0
    %331 = vmatpush1.msra.mxu0 0.0
    %332 = vmatprep.subr.mxu0 0.0
    %333 = vmatpush1.msra.mxu0 0.0
    %334 = vmatprep.subr.mxu0 0.0
    %335 = vmatpush1.msra.mxu0 0.0
    %336 = vmatprep.subr.mxu0 0.0
    %337 = vmatpush1.msra.mxu0 0.0
    %338 = vmatprep.subr.mxu0 0.0
    %339 = vmatpush1.msra.mxu0 0.0
    %340 = vmatprep.subr.mxu0 0.0
    %341 = vmatpush1.msra.mxu0 0.0
    %342 = vmatprep.subr.mxu0 0.0
    %343 = vmatpush1.msra.mxu0 0.0
    %344 = vmatprep.subr.mxu0 0.0
    %345 = vmatpush1.msra.mxu0 0.0
    %346 = vmatprep.subr.mxu0 0.0
    %347 = vmatpush1.msra.mxu0 0.0
    %348 = vmatprep.subr.mxu0 0.0
    %349 = vmatpush1.msra.mxu0 0.0
    %350 = vmatprep.subr.mxu0 0.0
    %351 = vmatpush1.msra.mxu0 0.0
    %352 = vmatprep.subr.mxu0 0.0
    %353 = vmatpush1.msra.mxu0 0.0
    %354 = vmatprep.subr.mxu0 0.0
    %355 = vmatpush1.msra.mxu0 0.0
    %356 = vmatprep.subr.mxu0 0.0
    %357 = vmatpush1.msra.mxu0 0.0
    %358 = vmatprep.subr.mxu0 0.0
    %359 = vmatpush1.msra.mxu0 0.0
    %360 = vmatprep.subr.mxu0 0.0
    %361 = vmatpush1.msra.mxu0 0.0
    %362 = vmatprep.subr.mxu0 0.0
    %363 = vmatpush1.msra.mxu0 0.0
    %364 = vmatprep.subr.mxu0 0.0
    %365 = vmatpush1.msra.mxu0 0.0
    %366 = vmatprep.subr.mxu0 0.0
    %367 = vmatpush1.msra.mxu0 0.0
    %368 = vmatprep.subr.mxu0 0.0
    %369 = vmatpush1.msra.mxu0 0.0
    %370 = vmatprep.subr.mxu0 0.0
    %371 = vmatpush1.msra.mxu0 0.0
    %372 = vmatprep.subr.mxu0 0.0
    %373 = vmatpush1.msra.mxu0 0.0
    %374 = vmatprep.subr.mxu0 0.0
    %375 = vmatpush1.msra.mxu0 0.0
    %376 = vmatprep.subr.mxu0 0.0
    %377 = vmatpush1.msra.mxu0 0.0
    %378 = vmatprep.subr.mxu0 0.0
    %379 = vmatpush1.msra.mxu0 0.0
    %380 = vmatprep.mubr.f32.mxu0 0.0
    %381 = vmatmul.mubr.f32.gmra.mrb[0].mxu0 %v314
    %v382 = vpop.f32.mrb[0].mxu0
    %v383 = vadd.f32 %v311, %v382
    %v384 = vpop.f32.mrb[0].mxu0
    %385 = vdwg.mxu0
    %vm386 = vcmask 517120
    %387 = vst.msk [vmem:[#allocation10] sm:$0x3] %vm386, %v383
    // Predicated region
    $region46: #{tpu_custom_call.1} parent=1 // pred_check
      _
    $region47: #{tpu_custom_call.1} parent=1 // pred_check_branch
      %389 = sbr.rel (0) target = $region49
    $region48: #{tpu_custom_call.1} parent=1 // pred_region
      %s391 = ssub.s32 32, 32
      %392 = vsyncadd [#allocation4], %s391
      %s394 = sshll.u32 [#allocation10], 4
      %s395 = int_to_ptr.vmem [resolvable:$true] %s394
      %397 = dma.vmem_to_hbm [thread:$0]  %s395, 32, %s7, [#allocation4]
    $region49: #{tpu_custom_call.1} parent=1 // pred_fallthru
      _
    // Predicated region
    $region50: #{tpu_custom_call.1} parent=1 // pred_check
      _
    $region51: #{tpu_custom_call.1} parent=1 // pred_check_branch
      %399 = sbr.rel (0) target = $region53
    $region52: #{tpu_custom_call.1} parent=1 // pred_region
      %400 = dma.done [#allocation4], 32
    $region53: #{tpu_custom_call.1} parent=1 // pred_fallthru
      _
    %401 = vsyncpa [#allocation3], 1
    %402 = vsyncpa [#allocation6], 1
    %403 = vsyncpa [#allocation9], 1
    %404 = vsyncpa [#allocation4], 1

</llo_original>
